<compile_context>
chip_gen: v6e
topology: v6e:2x2x1
jax: 0.10.0
libtpu: 0.0.40
codegen_flags: <defaults>
</compile_context>

<pallas_src>
import jax
import jax.numpy as jnp
from jax.experimental import pallas as pl
from jax.experimental.pallas import tpu as pltpu

INPUT_DIM = 5
HIDDEN_DIMS = [128, 128, 64, 32]
OUT_DIM = 1
DEFAULT_TILE_B = 512  # rows per grid step (multiple of 256 preferred on v6e/v7x)


def ann_kernel(x_ref,
               w0_ref, b0_ref,
               w1_ref, b1_ref,
               w2_ref, b2_ref,
               w3_ref, b3_ref,
               w4t_ref, b4_ref,
               o_ref):
    """One batch tile of the full MLP. Weights are VMEM-resident across steps."""
    x = x_ref[...].astype(jnp.float32)                 # (TB, 5)

    # --- Layer 0: Linear(5 -> 128) on the VPU (K=5 is too shallow for the MXU).
    h = b0_ref[...]                                    # (1, 128), broadcasts
    for k in range(INPUT_DIM):                         # static unroll: 5 FMAs
        h = h + x[:, k:k + 1] * w0_ref[k:k + 1, :]
    h = jnp.maximum(h, 0.0)                            # (TB, 128) fp32

    # --- Hidden layers: bf16 MXU matmul, fp32 accumulate, fp32 bias + ReLU.
    def dense_relu(h_f32, w_bf16_ref, b_ref):
        acc = jnp.dot(h_f32.astype(jnp.bfloat16), w_bf16_ref[...],
                      preferred_element_type=jnp.float32)
        return jnp.maximum(acc + b_ref[...], 0.0)

    h = dense_relu(h, w1_ref, b1_ref)                  # (TB, 128)
    h = dense_relu(h, w2_ref, b2_ref)                  # (TB, 64)
    h = dense_relu(h, w3_ref, b3_ref)                  # (TB, 32)

    # --- Output layer: Linear(32 -> 1) as multiply + lane reduce, then ReLU.
    out = jnp.sum(h * w4t_ref[...], axis=-1, keepdims=True) + b4_ref[...]
    o_ref[...] = jnp.maximum(out, 0.0).astype(o_ref.dtype)


def init_params(key):
    """Deterministic init mimicking PyTorch Linear default U[-1/sqrt(in), 1/sqrt(in)]."""
    dims = [INPUT_DIM] + HIDDEN_DIMS + [OUT_DIM]
    params = []
    for i in range(len(dims) - 1):
        fan_in, fan_out = dims[i], dims[i + 1]
        key, kw, kb = jax.random.split(key, 3)
        bound = 1.0 / jnp.sqrt(jnp.float32(fan_in))
        # stored as (in, out) so the kernel computes x @ W (== x @ W_torch.T)
        w = jax.random.uniform(kw, (fan_in, fan_out), jnp.float32, -bound, bound)
        b = jax.random.uniform(kb, (1, fan_out), jnp.float32, -bound, bound)
        params.append((w, b))
    return params


def ann_forward(x, params, tile_b=DEFAULT_TILE_B):
    batch = x.shape[0]
    (w0, b0), (w1, b1), (w2, b2), (w3, b3), (w4, b4) = params

    # bf16 weights for the MXU-fed layers; fp32 accumulation happens in-kernel.
    w1b = w1.astype(jnp.bfloat16)
    w2b = w2.astype(jnp.bfloat16)
    w3b = w3.astype(jnp.bfloat16)
    # (32, 1) -> (1, 32) row so the last layer is a broadcast-mul + lane reduce.
    w4t = w4.reshape(1, HIDDEN_DIMS[-1]).astype(jnp.float32)

    # Batch tile: multiple of 8 sublanes, capped at tile_b; pad tail rows.
    tb = min(tile_b, max(8, ((batch + 7) // 8) * 8))
    padded = pl.cdiv(batch, tb) * tb
    if padded != batch:
        x = jnp.pad(x, ((0, padded - batch), (0, 0)))
    grid = (padded // tb,)

    const = lambda i: (0, 0)  # weights/biases stay resident across grid steps
    in_specs = [
        pl.BlockSpec((tb, INPUT_DIM), lambda i: (i, 0)),            # x tile
        pl.BlockSpec(w0.shape, const),  pl.BlockSpec(b0.shape, const),
        pl.BlockSpec(w1b.shape, const), pl.BlockSpec(b1.shape, const),
        pl.BlockSpec(w2b.shape, const), pl.BlockSpec(b2.shape, const),
        pl.BlockSpec(w3b.shape, const), pl.BlockSpec(b3.shape, const),
        pl.BlockSpec(w4t.shape, const), pl.BlockSpec(b4.shape, const),
    ]
    out_spec = pl.BlockSpec((tb, OUT_DIM), lambda i: (i, 0))

    dims = [INPUT_DIM] + HIDDEN_DIMS + [OUT_DIM]
    layer_flops = sum(2 * dims[i] * dims[i + 1] for i in range(len(dims) - 1))
    param_bytes = sum(int(a.size) * a.dtype.itemsize
                      for a in (w0, b0, w1b, b1, w2b, b2, w3b, b3, w4t, b4))
    cost = pl.CostEstimate(
        flops=int(padded) * layer_flops,
        transcendentals=0,
        bytes_accessed=int(padded) * (INPUT_DIM + OUT_DIM) * 4 + param_bytes,
    )

    out = pl.pallas_call(
        ann_kernel,
        out_shape=jax.ShapeDtypeStruct((padded, OUT_DIM), jnp.float32),
        grid=grid,
        in_specs=in_specs,
        out_specs=out_spec,
        compiler_params=pltpu.CompilerParams(
            dimension_semantics=("parallel",)),
        cost_estimate=cost,
    )(x, w0, b0, w1b, b1, w2b, b2, w3b, b3, w4t, b4)

    return out[:batch]


def ann_reference(x, params):
    """Pure fp32 reference matching the PyTorch module semantics."""
    h = x
    for w, b in params:
        h = h @ w + b
        h = jnp.maximum(h, 0.0)  # ReLU after every layer, incl. output layer
    return h


if __name__ == "__main__":
    key = jax.random.PRNGKey(0)
    kx, kp = jax.random.split(key)

    batch = 20  # small, non-multiple of the tile -> exercises padding path
    x = jax.random.normal(kx, (batch, INPUT_DIM), jnp.float32)
    params = init_params(kp)

    # Small tile so the test also exercises multiple grid steps + tail padding.
    out = ann_forward(x, params, tile_b=8)
    out = jax.block_until_ready(out)

    ref = ann_reference(x, params)
    assert out.shape == (batch, OUT_DIM)
    # bf16 operands (fp32 accumulation) on the hidden layers -> loose tolerance.
    assert jnp.allclose(out, ref, atol=5e-2, rtol=5e-2), "mismatch vs reference"

    print("KERNEL_OK")
</pallas_src>

<mosaic_0001>
module attributes {stable_mosaic.version = 11 : i64} {
  func.func @ann_kernel(%arg0: i32, %arg1: memref<8x5xf32, #tpu.memory_space<vmem>>, %arg2: memref<5x128xf32, #tpu.memory_space<vmem>>, %arg3: memref<1x128xf32, #tpu.memory_space<vmem>>, %arg4: memref<128x128xbf16, #tpu.memory_space<vmem>>, %arg5: memref<1x128xf32, #tpu.memory_space<vmem>>, %arg6: memref<128x64xbf16, #tpu.memory_space<vmem>>, %arg7: memref<1x64xf32, #tpu.memory_space<vmem>>, %arg8: memref<64x32xbf16, #tpu.memory_space<vmem>>, %arg9: memref<1x32xf32, #tpu.memory_space<vmem>>, %arg10: memref<1x32xf32, #tpu.memory_space<vmem>>, %arg11: memref<1x1xf32, #tpu.memory_space<vmem>>, %arg12: memref<8x1xf32, #tpu.memory_space<vmem>>) attributes {dimension_semantics = [#tpu.dimension_semantics<parallel>], iteration_bounds = array<i64: 3>, scalar_prefetch = 0 : i64, scratch_operands = 0 : i64, tpu.core_type = #tpu.core_type<tc>, window_params = [{transform_indices = @transform_0, window_bounds = array<i64: 8, 5>}, {pipeline_mode = #tpu.pipeline_mode<synchronous>, transform_indices = @transform_1, window_bounds = array<i64: 5, 128>}, {pipeline_mode = #tpu.pipeline_mode<synchronous>, transform_indices = @transform_2, window_bounds = array<i64: 1, 128>}, {pipeline_mode = #tpu.pipeline_mode<synchronous>, transform_indices = @transform_3, window_bounds = array<i64: 128, 128>}, {pipeline_mode = #tpu.pipeline_mode<synchronous>, transform_indices = @transform_4, window_bounds = array<i64: 1, 128>}, {pipeline_mode = #tpu.pipeline_mode<synchronous>, transform_indices = @transform_5, window_bounds = array<i64: 128, 64>}, {pipeline_mode = #tpu.pipeline_mode<synchronous>, transform_indices = @transform_6, window_bounds = array<i64: 1, 64>}, {pipeline_mode = #tpu.pipeline_mode<synchronous>, transform_indices = @transform_7, window_bounds = array<i64: 64, 32>}, {pipeline_mode = #tpu.pipeline_mode<synchronous>, transform_indices = @transform_8, window_bounds = array<i64: 1, 32>}, {pipeline_mode = #tpu.pipeline_mode<synchronous>, transform_indices = @transform_9, window_bounds = array<i64: 1, 32>}, {pipeline_mode = #tpu.pipeline_mode<synchronous>, transform_indices = @transform_10, window_bounds = array<i64: 1, 1>}, {transform_indices = @transform_11, window_bounds = array<i64: 8, 1>}]} {
    %c0 = arith.constant 0 : index
    %c0_0 = arith.constant 0 : index
    %0 = vector.load %arg1[%c0, %c0_0] : memref<8x5xf32, #tpu.memory_space<vmem>>, vector<8x5xf32>
    %c0_1 = arith.constant 0 : index
    %c0_2 = arith.constant 0 : index
    %1 = vector.load %arg3[%c0_1, %c0_2] : memref<1x128xf32, #tpu.memory_space<vmem>>, vector<1x128xf32>
    %2 = vector.extract_strided_slice %0 {offsets = [0, 0], sizes = [8, 1], strides = [1, 1]} : vector<8x5xf32> to vector<8x1xf32>
    %c0_3 = arith.constant 0 : index
    %c0_4 = arith.constant 0 : index
    %3 = vector.load %arg2[%c0_3, %c0_4] : memref<5x128xf32, #tpu.memory_space<vmem>>, vector<1x128xf32>
    %4 = vector.broadcast %2 : vector<8x1xf32> to vector<8x128xf32>
    %5 = vector.broadcast %3 : vector<1x128xf32> to vector<8x128xf32>
    %6 = arith.mulf %4, %5 : vector<8x128xf32>
    %7 = vector.broadcast %1 : vector<1x128xf32> to vector<8x128xf32>
    %8 = arith.addf %7, %6 : vector<8x128xf32>
    %9 = vector.extract_strided_slice %0 {offsets = [0, 1], sizes = [8, 1], strides = [1, 1]} : vector<8x5xf32> to vector<8x1xf32>
    %c1 = arith.constant 1 : index
    %c0_5 = arith.constant 0 : index
    %10 = vector.load %arg2[%c1, %c0_5] : memref<5x128xf32, #tpu.memory_space<vmem>>, vector<1x128xf32>
    %11 = vector.broadcast %9 : vector<8x1xf32> to vector<8x128xf32>
    %12 = vector.broadcast %10 : vector<1x128xf32> to vector<8x128xf32>
    %13 = arith.mulf %11, %12 : vector<8x128xf32>
    %14 = arith.addf %8, %13 : vector<8x128xf32>
    %15 = vector.extract_strided_slice %0 {offsets = [0, 2], sizes = [8, 1], strides = [1, 1]} : vector<8x5xf32> to vector<8x1xf32>
    %c2 = arith.constant 2 : index
    %c0_6 = arith.constant 0 : index
    %16 = vector.load %arg2[%c2, %c0_6] : memref<5x128xf32, #tpu.memory_space<vmem>>, vector<1x128xf32>
    %17 = vector.broadcast %15 : vector<8x1xf32> to vector<8x128xf32>
    %18 = vector.broadcast %16 : vector<1x128xf32> to vector<8x128xf32>
    %19 = arith.mulf %17, %18 : vector<8x128xf32>
    %20 = arith.addf %14, %19 : vector<8x128xf32>
    %21 = vector.extract_strided_slice %0 {offsets = [0, 3], sizes = [8, 1], strides = [1, 1]} : vector<8x5xf32> to vector<8x1xf32>
    %c3 = arith.constant 3 : index
    %c0_7 = arith.constant 0 : index
    %22 = vector.load %arg2[%c3, %c0_7] : memref<5x128xf32, #tpu.memory_space<vmem>>, vector<1x128xf32>
    %23 = vector.broadcast %21 : vector<8x1xf32> to vector<8x128xf32>
    %24 = vector.broadcast %22 : vector<1x128xf32> to vector<8x128xf32>
    %25 = arith.mulf %23, %24 : vector<8x128xf32>
    %26 = arith.addf %20, %25 : vector<8x128xf32>
    %27 = vector.extract_strided_slice %0 {offsets = [0, 4], sizes = [8, 1], strides = [1, 1]} : vector<8x5xf32> to vector<8x1xf32>
    %c4 = arith.constant 4 : index
    %c0_8 = arith.constant 0 : index
    %28 = vector.load %arg2[%c4, %c0_8] : memref<5x128xf32, #tpu.memory_space<vmem>>, vector<1x128xf32>
    %29 = vector.broadcast %27 : vector<8x1xf32> to vector<8x128xf32>
    %30 = vector.broadcast %28 : vector<1x128xf32> to vector<8x128xf32>
    %31 = arith.mulf %29, %30 : vector<8x128xf32>
    %32 = arith.addf %26, %31 : vector<8x128xf32>
    %cst = arith.constant 0.000000e+00 : f32
    %33 = vector.broadcast %cst : f32 to vector<8x128xf32>
    %34 = arith.maximumf %32, %33 : vector<8x128xf32>
    %35 = arith.truncf %34 : vector<8x128xf32> to vector<8x128xbf16>
    %c0_9 = arith.constant 0 : index
    %c0_10 = arith.constant 0 : index
    %36 = vector.load %arg4[%c0_9, %c0_10] : memref<128x128xbf16, #tpu.memory_space<vmem>>, vector<128x128xbf16>
    %cst_11 = arith.constant dense<0.000000e+00> : vector<8x128xf32>
    %37 = tpu.matmul %35, %36, %cst_11 {dimension_numbers = #tpu.dot_dimension_numbers<[1], [0], [0], [1], [0, 0, 1, 1], [], []>} : vector<8x128xbf16>, vector<128x128xbf16>, vector<8x128xf32> -> vector<8x128xf32>
    %c0_12 = arith.constant 0 : index
    %c0_13 = arith.constant 0 : index
    %38 = vector.load %arg5[%c0_12, %c0_13] : memref<1x128xf32, #tpu.memory_space<vmem>>, vector<1x128xf32>
    %39 = vector.broadcast %38 : vector<1x128xf32> to vector<8x128xf32>
    %40 = arith.addf %37, %39 : vector<8x128xf32>
    %cst_14 = arith.constant 0.000000e+00 : f32
    %41 = vector.broadcast %cst_14 : f32 to vector<8x128xf32>
    %42 = arith.maximumf %40, %41 : vector<8x128xf32>
    %43 = arith.truncf %42 : vector<8x128xf32> to vector<8x128xbf16>
    %c0_15 = arith.constant 0 : index
    %c0_16 = arith.constant 0 : index
    %44 = vector.load %arg6[%c0_15, %c0_16] : memref<128x64xbf16, #tpu.memory_space<vmem>>, vector<128x64xbf16>
    %cst_17 = arith.constant dense<0.000000e+00> : vector<8x64xf32>
    %45 = tpu.matmul %43, %44, %cst_17 {dimension_numbers = #tpu.dot_dimension_numbers<[1], [0], [0], [1], [0, 0, 1, 1], [], []>} : vector<8x128xbf16>, vector<128x64xbf16>, vector<8x64xf32> -> vector<8x64xf32>
    %c0_18 = arith.constant 0 : index
    %c0_19 = arith.constant 0 : index
    %46 = vector.load %arg7[%c0_18, %c0_19] : memref<1x64xf32, #tpu.memory_space<vmem>>, vector<1x64xf32>
    %47 = vector.broadcast %46 : vector<1x64xf32> to vector<8x64xf32>
    %48 = arith.addf %45, %47 : vector<8x64xf32>
    %cst_20 = arith.constant 0.000000e+00 : f32
    %49 = vector.broadcast %cst_20 : f32 to vector<8x64xf32>
    %50 = arith.maximumf %48, %49 : vector<8x64xf32>
    %51 = arith.truncf %50 : vector<8x64xf32> to vector<8x64xbf16>
    %c0_21 = arith.constant 0 : index
    %c0_22 = arith.constant 0 : index
    %52 = vector.load %arg8[%c0_21, %c0_22] : memref<64x32xbf16, #tpu.memory_space<vmem>>, vector<64x32xbf16>
    %cst_23 = arith.constant dense<0.000000e+00> : vector<8x32xf32>
    %53 = tpu.matmul %51, %52, %cst_23 {dimension_numbers = #tpu.dot_dimension_numbers<[1], [0], [0], [1], [0, 0, 1, 1], [], []>} : vector<8x64xbf16>, vector<64x32xbf16>, vector<8x32xf32> -> vector<8x32xf32>
    %c0_24 = arith.constant 0 : index
    %c0_25 = arith.constant 0 : index
    %54 = vector.load %arg9[%c0_24, %c0_25] : memref<1x32xf32, #tpu.memory_space<vmem>>, vector<1x32xf32>
    %55 = vector.broadcast %54 : vector<1x32xf32> to vector<8x32xf32>
    %56 = arith.addf %53, %55 : vector<8x32xf32>
    %cst_26 = arith.constant 0.000000e+00 : f32
    %57 = vector.broadcast %cst_26 : f32 to vector<8x32xf32>
    %58 = arith.maximumf %56, %57 : vector<8x32xf32>
    %c0_27 = arith.constant 0 : index
    %c0_28 = arith.constant 0 : index
    %59 = vector.load %arg10[%c0_27, %c0_28] : memref<1x32xf32, #tpu.memory_space<vmem>>, vector<1x32xf32>
    %60 = vector.broadcast %59 : vector<1x32xf32> to vector<8x32xf32>
    %61 = arith.mulf %58, %60 : vector<8x32xf32>
    %cst_29 = arith.constant dense<0.000000e+00> : vector<8xf32>
    %62 = vector.multi_reduction <add>, %61, %cst_29 [1] : vector<8x32xf32> to vector<8xf32>
    %63 = vector.shape_cast %62 : vector<8xf32> to vector<8x1xf32>
    %c0_30 = arith.constant 0 : index
    %c0_31 = arith.constant 0 : index
    %64 = vector.load %arg11[%c0_30, %c0_31] : memref<1x1xf32, #tpu.memory_space<vmem>>, vector<1x1xf32>
    %65 = vector.broadcast %64 : vector<1x1xf32> to vector<8x1xf32>
    %66 = arith.addf %63, %65 : vector<8x1xf32>
    %cst_32 = arith.constant 0.000000e+00 : f32
    %67 = vector.broadcast %cst_32 : f32 to vector<8x1xf32>
    %68 = arith.maximumf %66, %67 : vector<8x1xf32>
    %c0_33 = arith.constant 0 : index
    %c0_34 = arith.constant 0 : index
    %69 = vector.load %arg12[%c0_33, %c0_34] : memref<8x1xf32, #tpu.memory_space<vmem>>, vector<8x1xf32>
    tpu.vector_store %arg12[%c0_33, %c0_34], %68 {strides = array<i32>} : memref<8x1xf32, #tpu.memory_space<vmem>>, vector<8x1xf32>,
    return
  }
  func.func @transform_0(%arg0: i32) -> (i32, i32) {
    %c0_i32 = arith.constant 0 : i32
    %c0_i32_0 = arith.constant 0 : i32
    return %arg0, %c0_i32 : i32, i32
  }
  func.func @transform_1(%arg0: i32) -> (i32, i32) {
    %c0_i32 = arith.constant 0 : i32
    %c0_i32_0 = arith.constant 0 : i32
    %c0_i32_1 = arith.constant 0 : i32
    return %c0_i32, %c0_i32_0 : i32, i32
  }
  func.func @transform_2(%arg0: i32) -> (i32, i32) {
    %c0_i32 = arith.constant 0 : i32
    %c0_i32_0 = arith.constant 0 : i32
    %c0_i32_1 = arith.constant 0 : i32
    return %c0_i32, %c0_i32_0 : i32, i32
  }
  func.func @transform_3(%arg0: i32) -> (i32, i32) {
    %c0_i32 = arith.constant 0 : i32
    %c0_i32_0 = arith.constant 0 : i32
    %c0_i32_1 = arith.constant 0 : i32
    return %c0_i32, %c0_i32_0 : i32, i32
  }
  func.func @transform_4(%arg0: i32) -> (i32, i32) {
    %c0_i32 = arith.constant 0 : i32
    %c0_i32_0 = arith.constant 0 : i32
    %c0_i32_1 = arith.constant 0 : i32
    return %c0_i32, %c0_i32_0 : i32, i32
  }
  func.func @transform_5(%arg0: i32) -> (i32, i32) {
    %c0_i32 = arith.constant 0 : i32
    %c0_i32_0 = arith.constant 0 : i32
    %c0_i32_1 = arith.constant 0 : i32
    return %c0_i32, %c0_i32_0 : i32, i32
  }
  func.func @transform_6(%arg0: i32) -> (i32, i32) {
    %c0_i32 = arith.constant 0 : i32
    %c0_i32_0 = arith.constant 0 : i32
    %c0_i32_1 = arith.constant 0 : i32
    return %c0_i32, %c0_i32_0 : i32, i32
  }
  func.func @transform_7(%arg0: i32) -> (i32, i32) {
    %c0_i32 = arith.constant 0 : i32
    %c0_i32_0 = arith.constant 0 : i32
    %c0_i32_1 = arith.constant 0 : i32
    return %c0_i32, %c0_i32_0 : i32, i32
  }
  func.func @transform_8(%arg0: i32) -> (i32, i32) {
    %c0_i32 = arith.constant 0 : i32
    %c0_i32_0 = arith.constant 0 : i32
    %c0_i32_1 = arith.constant 0 : i32
    return %c0_i32, %c0_i32_0 : i32, i32
  }
  func.func @transform_9(%arg0: i32) -> (i32, i32) {
    %c0_i32 = arith.constant 0 : i32
    %c0_i32_0 = arith.constant 0 : i32
    %c0_i32_1 = arith.constant 0 : i32
    return %c0_i32, %c0_i32_0 : i32, i32
  }
  func.func @transform_10(%arg0: i32) -> (i32, i32) {
    %c0_i32 = arith.constant 0 : i32
    %c0_i32_0 = arith.constant 0 : i32
    %c0_i32_1 = arith.constant 0 : i32
    return %c0_i32, %c0_i32_0 : i32, i32
  }
  func.func @transform_11(%arg0: i32) -> (i32, i32) {
    %c0_i32 = arith.constant 0 : i32
    %c0_i32_0 = arith.constant 0 : i32
    return %arg0, %c0_i32 : i32, i32
  }
}

</mosaic_0001>

<llo_original>
// kernel: tpu_custom_call.1
$region0: #{tpu_custom_call.1}
  #allocation0 [shape = 'u32[]', space=smem, size = 0x4, offset = 0x4, fixed_abs, tag = 'smem constant byte address 0x4 - core index']
  #allocation1 [shape = 'u32[144,128]{1,0:T(1,128)}', space=vmem, size = 0x12000, scoped, tag = 'internal scratch']
  #allocation2 [shape = 'f32[1,1]{1,0:T(1,128)S(1)}', space=vmem, size = 0x200, scoped, tag = 'scoped memory for tpu_custom_call.1']
  %s0 = inlined_call_operand.vmem [shape: f32[24,5], index: 0, kind: input, shape index: {}]
  %s1 = inlined_call_operand.vmem [shape: f32[5,128], index: 1, kind: input, shape index: {}]
  %s2 = inlined_call_operand.vmem [shape: f32[1,128], index: 2, kind: input, shape index: {}]
  %s3 = inlined_call_operand.vmem [shape: bf16[128,128], index: 3, kind: input, shape index: {}]
  %s4 = inlined_call_operand.vmem [shape: f32[1,128], index: 4, kind: input, shape index: {}]
  %s5 = inlined_call_operand.vmem [shape: bf16[128,64], index: 5, kind: input, shape index: {}]
  %s6 = inlined_call_operand.vmem [shape: f32[1,64], index: 6, kind: input, shape index: {}]
  %s7 = inlined_call_operand.vmem [shape: bf16[64,32], index: 7, kind: input, shape index: {}]
  %s8 = inlined_call_operand.vmem [shape: f32[1,32], index: 8, kind: input, shape index: {}]
  %s9 = inlined_call_operand.vmem [shape: f32[1,32], index: 9, kind: input, shape index: {}]
  %s10 = inlined_call_operand.<no memory space> [shape: f32[1,1], index: 10, kind: input, shape index: {}]
  %s11 = inlined_call_operand.vmem [shape: f32[24,1], index: 11, kind: output, shape index: {}]
  %s12 = sld [smem:[#allocation0]]
  $region77: #{tpu_custom_call.1} parent=0
    _
  %s14 = ssub.s32 1, %s12
  %s15 = scalar_select 0, %s14, %s12
  %v16 = vstv %s10
  %17 = vst [vmem:[#allocation2] sm:$0x1] %v16
  loop: start=0, step=1, limit=5
  $region2: #{tpu_custom_call.1} parent=0 // loop_pre_header
    _
  $region3: #{tpu_custom_call.1} parent=0 // loop_header
    %s19 = sphi 0, %s23
    %p20 = scmp.ge.s32.totalorder %s19, 5
    %s29 = sphi 0, %s31
    %s32 = sphi 0, %s29
    %s33 = sphi 0, %s32
    %s49 = sphi 0, %s33
    %s53 = sphi 0, %s53
    %s55 = sphi 0, %s53
    %s56 = sphi 0, %s55
    %s70 = sphi 0, %s56
    %s74 = sphi 0, %s74
    %s76 = sphi 0, %s74
    %s77 = sphi 0, %s76
    %s91 = sphi 0, %s77
    %s95 = sphi 0, %s95
    %s97 = sphi 0, %s95
    %s98 = sphi 0, %s97
    %s112 = sphi 0, %s98
    %s116 = sphi 0, %s116
    %s118 = sphi 0, %s116
    %s119 = sphi 0, %s118
    %s133 = sphi 0, %s119
    %s137 = sphi 0, %s137
    %s139 = sphi 0, %s137
    %s140 = sphi 0, %s139
    %s154 = sphi 0, %s140
    %s158 = sphi 0, %s158
    %s160 = sphi 0, %s158
    %s161 = sphi 0, %s160
    %s175 = sphi 0, %s161
    %s179 = sphi 0, %s179
    %s181 = sphi 0, %s179
    %s182 = sphi 0, %s181
    %s196 = sphi 0, %s182
    %s200 = sphi 0, %s200
    %s202 = sphi 0, %s200
    %s203 = sphi 0, %s202
    %s217 = sphi 0, %s203
    %s221 = sphi 0, %s221
    %s223 = sphi 0, %s221
    %s224 = sphi 0, %s223
    %s238 = sphi 0, %s224
    %s242 = sphi 0, %s242
    %s244 = sphi 0, %s242
    %s245 = sphi 0, %s244
    %s259 = sphi 0, %s245
    %s265 = sphi 0, %s267
    %s268 = sphi 0, %s265
    %s269 = sphi 0, %s268
    %s285 = sphi 0, %s269
  $region4: #{tpu_custom_call.1} parent=0 // loop_header_branch
    %22 = sbr.rel (%p20) target = $region8
  $region5: #{tpu_custom_call.1} parent=0 // loop_body
    %s24 = ssub.s32 %s19, 1
    %s25 = ssub.s32 %s19, 2
    %s26 = sadd.s32 %s19, 1
    %s27 = ssub.s32 %s19, %s26
    %p28 = scmp.eq.s32.totalorder %s27, 0
    %s30 = sadd.s32 %s29, 1
    %s31 = scalar_select %p28, %s29, %s30
    %p34 = pneg %p28
    %p35 = scmp.eq.s32.totalorder %s19, 2
    %p36 = por %p34, %p35
    %p37 = scmp.ne.s32.totalorder %s29, %s32
    %p38 = scmp.eq.s32.totalorder %s19, 0
    %p39 = por %p37, %p38
    %p40 = scmp.ne.s32.totalorder %s29, %s32
    %p41 = scmp.eq.s32.totalorder %s24, 2
    %p42 = por %p40, %p41
    %p43 = scmp.ne.s32.totalorder %s32, %s33
    %p44 = scmp.eq.s32.totalorder %s24, 0
    %p45 = por %p43, %p44
    %p46 = scmp.ne.s32.totalorder %s32, %s33
    %p47 = scmp.eq.s32.totalorder %s25, 2
    %p48 = por %p46, %p47
    %p50 = scmp.ne.s32.totalorder %s33, %s49
    %p51 = scmp.eq.s32.totalorder %s25, 0
    %p52 = por %p50, %p51
    %s54 = sadd.s32 %s53, 1
    %p57 = scmp.eq.s32.totalorder %s19, 2
    %p58 = scmp.ne.s32.totalorder %s53, %s55
    %p59 = scmp.eq.s32.totalorder %s19, 0
    %p60 = por %p58, %p59
    %p61 = scmp.ne.s32.totalorder %s53, %s55
    %p62 = scmp.eq.s32.totalorder %s24, 2
    %p63 = por %p61, %p62
    %p64 = scmp.ne.s32.totalorder %s55, %s56
    %p65 = scmp.eq.s32.totalorder %s24, 0
    %p66 = por %p64, %p65
    %p67 = scmp.ne.s32.totalorder %s55, %s56
    %p68 = scmp.eq.s32.totalorder %s25, 2
    %p69 = por %p67, %p68
    %p71 = scmp.ne.s32.totalorder %s56, %s70
    %p72 = scmp.eq.s32.totalorder %s25, 0
    %p73 = por %p71, %p72
    %s75 = sadd.s32 %s74, 1
    %p78 = scmp.eq.s32.totalorder %s19, 2
    %p79 = scmp.ne.s32.totalorder %s74, %s76
    %p80 = scmp.eq.s32.totalorder %s19, 0
    %p81 = por %p79, %p80
    %p82 = scmp.ne.s32.totalorder %s74, %s76
    %p83 = scmp.eq.s32.totalorder %s24, 2
    %p84 = por %p82, %p83
    %p85 = scmp.ne.s32.totalorder %s76, %s77
    %p86 = scmp.eq.s32.totalorder %s24, 0
    %p87 = por %p85, %p86
    %p88 = scmp.ne.s32.totalorder %s76, %s77
    %p89 = scmp.eq.s32.totalorder %s25, 2
    %p90 = por %p88, %p89
    %p92 = scmp.ne.s32.totalorder %s77, %s91
    %p93 = scmp.eq.s32.totalorder %s25, 0
    %p94 = por %p92, %p93
    %s96 = sadd.s32 %s95, 1
    %p99 = scmp.eq.s32.totalorder %s19, 2
    %p100 = scmp.ne.s32.totalorder %s95, %s97
    %p101 = scmp.eq.s32.totalorder %s19, 0
    %p102 = por %p100, %p101
    %p103 = scmp.ne.s32.totalorder %s95, %s97
    %p104 = scmp.eq.s32.totalorder %s24, 2
    %p105 = por %p103, %p104
    %p106 = scmp.ne.s32.totalorder %s97, %s98
    %p107 = scmp.eq.s32.totalorder %s24, 0
    %p108 = por %p106, %p107
    %p109 = scmp.ne.s32.totalorder %s97, %s98
    %p110 = scmp.eq.s32.totalorder %s25, 2
    %p111 = por %p109, %p110
    %p113 = scmp.ne.s32.totalorder %s98, %s112
    %p114 = scmp.eq.s32.totalorder %s25, 0
    %p115 = por %p113, %p114
    %s117 = sadd.s32 %s116, 1
    %p120 = scmp.eq.s32.totalorder %s19, 2
    %p121 = scmp.ne.s32.totalorder %s116, %s118
    %p122 = scmp.eq.s32.totalorder %s19, 0
    %p123 = por %p121, %p122
    %p124 = scmp.ne.s32.totalorder %s116, %s118
    %p125 = scmp.eq.s32.totalorder %s24, 2
    %p126 = por %p124, %p125
    %p127 = scmp.ne.s32.totalorder %s118, %s119
    %p128 = scmp.eq.s32.totalorder %s24, 0
    %p129 = por %p127, %p128
    %p130 = scmp.ne.s32.totalorder %s118, %s119
    %p131 = scmp.eq.s32.totalorder %s25, 2
    %p132 = por %p130, %p131
    %p134 = scmp.ne.s32.totalorder %s119, %s133
    %p135 = scmp.eq.s32.totalorder %s25, 0
    %p136 = por %p134, %p135
    %s138 = sadd.s32 %s137, 1
    %p141 = scmp.eq.s32.totalorder %s19, 2
    %p142 = scmp.ne.s32.totalorder %s137, %s139
    %p143 = scmp.eq.s32.totalorder %s19, 0
    %p144 = por %p142, %p143
    %p145 = scmp.ne.s32.totalorder %s137, %s139
    %p146 = scmp.eq.s32.totalorder %s24, 2
    %p147 = por %p145, %p146
    %p148 = scmp.ne.s32.totalorder %s139, %s140
    %p149 = scmp.eq.s32.totalorder %s24, 0
    %p150 = por %p148, %p149
    %p151 = scmp.ne.s32.totalorder %s139, %s140
    %p152 = scmp.eq.s32.totalorder %s25, 2
    %p153 = por %p151, %p152
    %p155 = scmp.ne.s32.totalorder %s140, %s154
    %p156 = scmp.eq.s32.totalorder %s25, 0
    %p157 = por %p155, %p156
    %s159 = sadd.s32 %s158, 1
    %p162 = scmp.eq.s32.totalorder %s19, 2
    %p163 = scmp.ne.s32.totalorder %s158, %s160
    %p164 = scmp.eq.s32.totalorder %s19, 0
    %p165 = por %p163, %p164
    %p166 = scmp.ne.s32.totalorder %s158, %s160
    %p167 = scmp.eq.s32.totalorder %s24, 2
    %p168 = por %p166, %p167
    %p169 = scmp.ne.s32.totalorder %s160, %s161
    %p170 = scmp.eq.s32.totalorder %s24, 0
    %p171 = por %p169, %p170
    %p172 = scmp.ne.s32.totalorder %s160, %s161
    %p173 = scmp.eq.s32.totalorder %s25, 2
    %p174 = por %p172, %p173
    %p176 = scmp.ne.s32.totalorder %s161, %s175
    %p177 = scmp.eq.s32.totalorder %s25, 0
    %p178 = por %p176, %p177
    %s180 = sadd.s32 %s179, 1
    %p183 = scmp.eq.s32.totalorder %s19, 2
    %p184 = scmp.ne.s32.totalorder %s179, %s181
    %p185 = scmp.eq.s32.totalorder %s19, 0
    %p186 = por %p184, %p185
    %p187 = scmp.ne.s32.totalorder %s179, %s181
    %p188 = scmp.eq.s32.totalorder %s24, 2
    %p189 = por %p187, %p188
    %p190 = scmp.ne.s32.totalorder %s181, %s182
    %p191 = scmp.eq.s32.totalorder %s24, 0
    %p192 = por %p190, %p191
    %p193 = scmp.ne.s32.totalorder %s181, %s182
    %p194 = scmp.eq.s32.totalorder %s25, 2
    %p195 = por %p193, %p194
    %p197 = scmp.ne.s32.totalorder %s182, %s196
    %p198 = scmp.eq.s32.totalorder %s25, 0
    %p199 = por %p197, %p198
    %s201 = sadd.s32 %s200, 1
    %p204 = scmp.eq.s32.totalorder %s19, 2
    %p205 = scmp.ne.s32.totalorder %s200, %s202
    %p206 = scmp.eq.s32.totalorder %s19, 0
    %p207 = por %p205, %p206
    %p208 = scmp.ne.s32.totalorder %s200, %s202
    %p209 = scmp.eq.s32.totalorder %s24, 2
    %p210 = por %p208, %p209
    %p211 = scmp.ne.s32.totalorder %s202, %s203
    %p212 = scmp.eq.s32.totalorder %s24, 0
    %p213 = por %p211, %p212
    %p214 = scmp.ne.s32.totalorder %s202, %s203
    %p215 = scmp.eq.s32.totalorder %s25, 2
    %p216 = por %p214, %p215
    %p218 = scmp.ne.s32.totalorder %s203, %s217
    %p219 = scmp.eq.s32.totalorder %s25, 0
    %p220 = por %p218, %p219
    %s222 = sadd.s32 %s221, 1
    %p225 = scmp.eq.s32.totalorder %s19, 2
    %p226 = scmp.ne.s32.totalorder %s221, %s223
    %p227 = scmp.eq.s32.totalorder %s19, 0
    %p228 = por %p226, %p227
    %p229 = scmp.ne.s32.totalorder %s221, %s223
    %p230 = scmp.eq.s32.totalorder %s24, 2
    %p231 = por %p229, %p230
    %p232 = scmp.ne.s32.totalorder %s223, %s224
    %p233 = scmp.eq.s32.totalorder %s24, 0
    %p234 = por %p232, %p233
    %p235 = scmp.ne.s32.totalorder %s223, %s224
    %p236 = scmp.eq.s32.totalorder %s25, 2
    %p237 = por %p235, %p236
    %p239 = scmp.ne.s32.totalorder %s224, %s238
    %p240 = scmp.eq.s32.totalorder %s25, 0
    %p241 = por %p239, %p240
    %s243 = sadd.s32 %s242, 1
    %p246 = scmp.eq.s32.totalorder %s19, 2
    %p247 = scmp.ne.s32.totalorder %s242, %s244
    %p248 = scmp.eq.s32.totalorder %s19, 0
    %p249 = por %p247, %p248
    %p250 = scmp.ne.s32.totalorder %s242, %s244
    %p251 = scmp.eq.s32.totalorder %s24, 2
    %p252 = por %p250, %p251
    %p253 = scmp.ne.s32.totalorder %s244, %s245
    %p254 = scmp.eq.s32.totalorder %s24, 0
    %p255 = por %p253, %p254
    %p256 = scmp.ne.s32.totalorder %s244, %s245
    %p257 = scmp.eq.s32.totalorder %s25, 2
    %p258 = por %p256, %p257
    %p260 = scmp.ne.s32.totalorder %s245, %s259
    %p261 = scmp.eq.s32.totalorder %s25, 0
    %p262 = por %p260, %p261
    %s263 = ssub.s32 %s19, %s26
    %p264 = scmp.eq.s32.totalorder %s263, 0
    %s266 = sadd.s32 %s265, 1
    %s267 = scalar_select %p264, %s265, %s266
    %p270 = pneg %p264
    %p271 = scmp.eq.s32.totalorder %s19, 2
    %p272 = por %p270, %p271
    %p273 = scmp.ne.s32.totalorder %s265, %s268
    %p274 = scmp.eq.s32.totalorder %s19, 0
    %p275 = por %p273, %p274
    %p276 = scmp.ne.s32.totalorder %s265, %s268
    %p277 = scmp.eq.s32.totalorder %s24, 2
    %p278 = por %p276, %p277
    %p279 = scmp.ne.s32.totalorder %s268, %s269
    %p280 = scmp.eq.s32.totalorder %s24, 0
    %p281 = por %p279, %p280
    %p282 = scmp.ne.s32.totalorder %s268, %s269
    %p283 = scmp.eq.s32.totalorder %s25, 2
    %p284 = por %p282, %p283
    %p286 = scmp.ne.s32.totalorder %s269, %s285
    %p287 = scmp.eq.s32.totalorder %s25, 0
    %p288 = por %p286, %p287
    %p289 = scmp.le.s32.totalorder 1, %s19
    %p290 = scmp.lt.s32.totalorder %s19, 4
    %p291 = pnand %p289, %p290
    %p292 = pneg %p291
    // Predicated region
    $region9: #{tpu_custom_call.1} parent=5 // pred_check
      _
    $region10: #{tpu_custom_call.1} parent=5 // pred_check_branch
      %294 = sbr.rel (%p291) target = $region12
    $region11: #{tpu_custom_call.1} parent=5 // pred_region
      %s295 = ssub.s32 %s19, 1
      // Predicated region
      $region13: #{tpu_custom_call.1} parent=11 // pred_check
        %p296 = pneg %p66
      $region14: #{tpu_custom_call.1} parent=11 // pred_check_branch
        %298 = sbr.rel (%p296) target = $region16
      $region15: #{tpu_custom_call.1} parent=11 // pred_region
        _
      $region16: #{tpu_custom_call.1} parent=11 // pred_fallthru
        _
      // Predicated region
      $region17: #{tpu_custom_call.1} parent=11 // pred_check
        %p299 = pneg %p87
      $region18: #{tpu_custom_call.1} parent=11 // pred_check_branch
        %301 = sbr.rel (%p299) target = $region20
      $region19: #{tpu_custom_call.1} parent=11 // pred_region
        _
      $region20: #{tpu_custom_call.1} parent=11 // pred_fallthru
        _
      // Predicated region
      $region21: #{tpu_custom_call.1} parent=11 // pred_check
        %p302 = pneg %p108
      $region22: #{tpu_custom_call.1} parent=11 // pred_check_branch
        %304 = sbr.rel (%p302) target = $region24
      $region23: #{tpu_custom_call.1} parent=11 // pred_region
        _
      $region24: #{tpu_custom_call.1} parent=11 // pred_fallthru
        _
      // Predicated region
      $region25: #{tpu_custom_call.1} parent=11 // pred_check
        %p305 = pneg %p129
      $region26: #{tpu_custom_call.1} parent=11 // pred_check_branch
        %307 = sbr.rel (%p305) target = $region28
      $region27: #{tpu_custom_call.1} parent=11 // pred_region
        _
      $region28: #{tpu_custom_call.1} parent=11 // pred_fallthru
        _
      // Predicated region
      $region29: #{tpu_custom_call.1} parent=11 // pred_check
        %p308 = pneg %p150
      $region30: #{tpu_custom_call.1} parent=11 // pred_check_branch
        %310 = sbr.rel (%p308) target = $region32
      $region31: #{tpu_custom_call.1} parent=11 // pred_region
        _
      $region32: #{tpu_custom_call.1} parent=11 // pred_fallthru
        _
      // Predicated region
      $region33: #{tpu_custom_call.1} parent=11 // pred_check
        %p311 = pneg %p171
      $region34: #{tpu_custom_call.1} parent=11 // pred_check_branch
        %313 = sbr.rel (%p311) target = $region36
      $region35: #{tpu_custom_call.1} parent=11 // pred_region
        _
      $region36: #{tpu_custom_call.1} parent=11 // pred_fallthru
        _
      // Predicated region
      $region37: #{tpu_custom_call.1} parent=11 // pred_check
        %p314 = pneg %p192
      $region38: #{tpu_custom_call.1} parent=11 // pred_check_branch
        %316 = sbr.rel (%p314) target = $region40
      $region39: #{tpu_custom_call.1} parent=11 // pred_region
        _
      $region40: #{tpu_custom_call.1} parent=11 // pred_fallthru
        _
      // Predicated region
      $region41: #{tpu_custom_call.1} parent=11 // pred_check
        %p317 = pneg %p213
      $region42: #{tpu_custom_call.1} parent=11 // pred_check_branch
        %319 = sbr.rel (%p317) target = $region44
      $region43: #{tpu_custom_call.1} parent=11 // pred_region
        _
      $region44: #{tpu_custom_call.1} parent=11 // pred_fallthru
        _
      // Predicated region
      $region45: #{tpu_custom_call.1} parent=11 // pred_check
        %p320 = pneg %p234
      $region46: #{tpu_custom_call.1} parent=11 // pred_check_branch
        %322 = sbr.rel (%p320) target = $region48
      $region47: #{tpu_custom_call.1} parent=11 // pred_region
        _
      $region48: #{tpu_custom_call.1} parent=11 // pred_fallthru
        _
      // Predicated region
      $region49: #{tpu_custom_call.1} parent=11 // pred_check
        %p323 = pneg %p255
      $region50: #{tpu_custom_call.1} parent=11 // pred_check_branch
        %325 = sbr.rel (%p323) target = $region52
      $region51: #{tpu_custom_call.1} parent=11 // pred_region
        _
      $region52: #{tpu_custom_call.1} parent=11 // pred_fallthru
        _
    $region12: #{tpu_custom_call.1} parent=5 // pred_fallthru
      _
    %p326 = scmp.lt.s32.totalorder %s19, 3
    // Predicated region
    $region53: #{tpu_custom_call.1} parent=5 // pred_check
      %p327 = pneg %p326
    $region54: #{tpu_custom_call.1} parent=5 // pred_check_branch
      %329 = sbr.rel (%p327) target = $region56
    $region55: #{tpu_custom_call.1} parent=5 // pred_region
      // Predicated region
      $region57: #{tpu_custom_call.1} parent=55 // pred_check
        %p330 = pneg %p39
      $region58: #{tpu_custom_call.1} parent=55 // pred_check_branch
        %332 = sbr.rel (%p330) target = $region60
      $region59: #{tpu_custom_call.1} parent=55 // pred_region
        %p333 = scmp.lt.s32.totalorder %s19, 2
        %s334 = scalar_select %p333, %s19, 2
        %s335 = smul.addr %s334, 8
        %s336 = scalar_lea.vmem %s0, %s335
      $region60: #{tpu_custom_call.1} parent=55 // pred_fallthru
        _
    $region56: #{tpu_custom_call.1} parent=5 // pred_fallthru
      _
    %p337 = scmp.le.s32.totalorder 1, %s19
    %p338 = scmp.lt.s32.totalorder %s19, 4
    %p339 = pnand %p337, %p338
    %p340 = pneg %p339
    // Predicated region
    $region61: #{tpu_custom_call.1} parent=5 // pred_check
      _
    $region62: #{tpu_custom_call.1} parent=5 // pred_check_branch
      %342 = sbr.rel (%p339) target = $region64
    $region63: #{tpu_custom_call.1} parent=5 // pred_region
      %s343 = ssub.s32 %s19, 1
      %p344 = scmp.lt.s32.totalorder %s24, 2
      %s345 = scalar_select %p344, %s24, 2
      %s346 = smul.addr %s345, 8
      %s347 = scalar_lea.vmem %s0, %s346
      %p348 = pneg %p45
      %p349 = pneg %p42
      %p350 = pneg %p66
      %p351 = pneg %p63
      %p352 = pneg %p87
      %p353 = pneg %p84
      %p354 = pneg %p108
      %p355 = pneg %p105
      %p356 = pneg %p129
      %p357 = pneg %p126
      %p358 = pneg %p150
      %p359 = pneg %p147
      %p360 = pneg %p171
      %p361 = pneg %p168
      %p362 = pneg %p192
      %p363 = pneg %p189
      %p364 = pneg %p213
      %p365 = pneg %p210
      %p366 = pneg %p234
      %p367 = pneg %p231
      %p368 = pneg %p255
      %p369 = pneg %p252
      %p370 = pneg %p281
      %p371 = pneg %p278
      %p372 = scmp.lt.s32.totalorder %s24, 2
      %s373 = scalar_select %p372, %s24, 2
      %s374 = smul.addr %s373, 8
      %s375 = scalar_lea.vmem %s11, %s374
      %p376 = scmp.lt.s32.totalorder %s24, 2
      %s377 = scalar_select %p376, %s24, 2
      %s378 = smul.addr %s377, 8
      %s379 = scalar_lea.vmem %s0, %s378
      %p380 = scmp.lt.s32.totalorder %s24, 2
      %s381 = scalar_select %p380, %s24, 2
      %s382 = smul.addr %s381, 8
      %s383 = scalar_lea.vmem %s11, %s382
      %v385 = vld [vmem:[%s379] sm:$0xff]
      %v386 = vld [vmem:[%s2] sm:$0x1]
      %v387 = vld [vmem:[%s1] sm:$0x1]
      %389 = vset.pattern.permute.xlu0 0
      %390 = vperm.xlu0 %389, %v385
      %v391 = vpop.permute.xlu0 %390
      %v393 = vlaneseq
      %v394 = vshrl.u32 %v393, 7
      %v395 = vsub.s32 0, %v394
      %v396 = vrot.slane %v387, %v395
      %v397 = vmul.f32 %v391, %v396
      %v399 = vlaneseq
      %v400 = vshrl.u32 %v399, 7
      %v401 = vsub.s32 0, %v400
      %v402 = vrot.slane %v386, %v401
      %v404 = vadd.f32 %v402, %v397
      %v405 = vld [vmem:[%s1 + $0x1] sm:$0x1]
      %406 = vset.pattern.permute.xlu0 1
      %407 = vperm.xlu0 %406, %v385
      %v408 = vpop.permute.xlu0 %407
      %v410 = vlaneseq
      %v411 = vshrl.u32 %v410, 7
      %v412 = vsub.s32 0, %v411
      %v413 = vrot.slane %v405, %v412
      %v414 = vmul.f32 %v408, %v413
      %v415 = vadd.f32 %v404, %v414
      %v416 = vld [vmem:[%s1 + $0x2] sm:$0x1]
      %417 = vset.pattern.permute.xlu0 2
      %418 = vperm.xlu0 %417, %v385
      %v419 = vpop.permute.xlu0 %418
      %v421 = vlaneseq
      %v422 = vshrl.u32 %v421, 7
      %v423 = vsub.s32 0, %v422
      %v424 = vrot.slane %v416, %v423
      %v425 = vmul.f32 %v419, %v424
      %v426 = vadd.f32 %v415, %v425
      %v427 = vld [vmem:[%s1 + $0x3] sm:$0x1]
      %428 = vset.pattern.permute.xlu0 3
      %429 = vperm.xlu0 %428, %v385
      %v430 = vpop.permute.xlu0 %429
      %v432 = vlaneseq
      %v433 = vshrl.u32 %v432, 7
      %v434 = vsub.s32 0, %v433
      %v435 = vrot.slane %v427, %v434
      %v436 = vmul.f32 %v430, %v435
      %v437 = vadd.f32 %v426, %v436
      %v438 = vld [vmem:[%s1 + $0x4] sm:$0x1]
      %439 = vset.pattern.permute.xlu0 4
      %440 = vperm.xlu0 %439, %v385
      %v441 = vpop.permute.xlu0 %440
      %v443 = vlaneseq
      %v444 = vshrl.u32 %v443, 7
      %v445 = vsub.s32 0, %v444
      %v446 = vrot.slane %v438, %v445
      %v447 = vmul.f32 %v441, %v446
      %v448 = vadd.f32 %v437, %v447
      %v449 = vmax.f32 %v448, 0.0
      %v450 = vpack.c.bf16 %v449, %v449
      %v451 = vld [vmem:[%s3] sm:$0xf]
      %v452 = vld [vmem:[%s3 + $0x4] sm:$0xf]
      %v453 = vld [vmem:[%s3 + $0x8] sm:$0xf]
      %v454 = vld [vmem:[%s3 + $0xc] sm:$0xf]
      %v455 = vld [vmem:[%s3 + $0x10] sm:$0xf]
      %v456 = vld [vmem:[%s3 + $0x14] sm:$0xf]
      %v457 = vld [vmem:[%s3 + $0x18] sm:$0xf]
      %v458 = vld [vmem:[%s3 + $0x1c] sm:$0xf]
      %v459 = vld [vmem:[%s3 + $0x20] sm:$0xf]
      %v460 = vld [vmem:[%s3 + $0x24] sm:$0xf]
      %v461 = vld [vmem:[%s3 + $0x28] sm:$0xf]
      %v462 = vld [vmem:[%s3 + $0x2c] sm:$0xf]
      %v463 = vld [vmem:[%s3 + $0x30] sm:$0xf]
      %v464 = vld [vmem:[%s3 + $0x34] sm:$0xf]
      %v465 = vld [vmem:[%s3 + $0x38] sm:$0xf]
      %v466 = vld [vmem:[%s3 + $0x3c] sm:$0xf]
      %v467 = vld [vmem:[%s4] sm:$0x1]
      %v469 = vlaneseq
      %v470 = vshrl.u32 %v469, 7
      %v471 = vsub.s32 0, %v470
      %v472 = vrot.slane %v467, %v471
      %v490 = vunpack.c.l.b16 %v451
      %v491 = vunpack.c.l.b16 %v452
      %v492 = vunpack.c.l.b16 %v453
      %v493 = vunpack.c.l.b16 %v454
      %v494 = vunpack.c.l.b16 %v455
      %v495 = vunpack.c.l.b16 %v456
      %v496 = vunpack.c.l.b16 %v457
      %v497 = vunpack.c.l.b16 %v458
      %v498 = vunpack.c.l.b16 %v459
      %v499 = vunpack.c.l.b16 %v460
      %v500 = vunpack.c.l.b16 %v461
      %v501 = vunpack.c.l.b16 %v462
      %v502 = vunpack.c.l.b16 %v463
      %v503 = vunpack.c.l.b16 %v464
      %v504 = vunpack.c.l.b16 %v465
      %v505 = vunpack.c.l.b16 %v466
      %v506 = vpack.c.b16 %v491, %v490
      %v507 = vpack.c.b16 %v493, %v492
      %v508 = vpack.c.b16 %v495, %v494
      %v509 = vpack.c.b16 %v497, %v496
      %v510 = vpack.c.b16 %v499, %v498
      %v511 = vpack.c.b16 %v501, %v500
      %v512 = vpack.c.b16 %v503, %v502
      %v513 = vpack.c.b16 %v505, %v504
      %522 = vmatprep.subr.bf16.mxu0 0
      %523 = vmatpush1.bf16.msra.mxu0 %v513
      %524 = vmatprep.subr.bf16.mxu0 0
      %525 = vmatpush1.bf16.msra.mxu0 %v512
      %526 = vmatprep.subr.bf16.mxu0 0
      %527 = vmatpush1.bf16.msra.mxu0 %v511
      %528 = vmatprep.subr.bf16.mxu0 0
      %529 = vmatpush1.bf16.msra.mxu0 %v510
      %530 = vmatprep.subr.bf16.mxu0 0
      %531 = vmatpush1.bf16.msra.mxu0 %v509
      %532 = vmatprep.subr.bf16.mxu0 0
      %533 = vmatpush1.bf16.msra.mxu0 %v508
      %534 = vmatprep.subr.bf16.mxu0 0
      %535 = vmatpush1.bf16.msra.mxu0 %v507
      %536 = vmatprep.subr.bf16.mxu0 0
      %537 = vmatpush1.bf16.msra.mxu0 %v506
      %538 = vmatprep.subr.bf16.mxu0 0
      %539 = vmatpush2.bf16.msra.mxu0 0
      %540 = vmatprep.subr.bf16.mxu0 0
      %541 = vmatpush2.bf16.msra.mxu0 0
      %542 = vmatprep.subr.bf16.mxu0 0
      %543 = vmatpush2.bf16.msra.mxu0 0
      %544 = vmatprep.subr.bf16.mxu0 0
      %545 = vmatpush2.bf16.msra.mxu0 0
      %546 = vmatprep.subr.bf16.mxu0 0
      %547 = vmatpush2.bf16.msra.mxu0 0
      %548 = vmatprep.subr.bf16.mxu0 0
      %549 = vmatpush2.bf16.msra.mxu0 0
      %550 = vmatprep.subr.bf16.mxu0 0
      %551 = vmatpush2.bf16.msra.mxu0 0
      %552 = vmatprep.subr.bf16.mxu0 0
      %553 = vmatpush2.bf16.msra.mxu0 0
      %554 = vmatprep.mubr.bf16.mxu0 0
      %555 = vmatmul.mubr.bf16.gmra.mxu0 %v450
      %v556 = vpop.f32.mrf.mxu0
      %v557 = vadd.f32 %v472, %v556
      %v558 = vpop.f32.mrf.mxu0
      %v559 = vpop.f32.mrf.mxu0
      %v560 = vpop.f32.mrf.mxu0
      %561 = vdwg.mxu0
      %v562 = vmax.f32 %v557, 0.0
      %v563 = vpack.c.bf16 %v562, %v562
      %v564 = vld [vmem:[%s5] sm:$0xf]
      %v565 = vld [vmem:[%s5 + $0x4] sm:$0xf]
      %v566 = vld [vmem:[%s5 + $0x8] sm:$0xf]
      %v567 = vld [vmem:[%s5 + $0xc] sm:$0xf]
      %v568 = vld [vmem:[%s5 + $0x10] sm:$0xf]
      %v569 = vld [vmem:[%s5 + $0x14] sm:$0xf]
      %v570 = vld [vmem:[%s5 + $0x18] sm:$0xf]
      %v571 = vld [vmem:[%s5 + $0x1c] sm:$0xf]
      %v572 = vld [vmem:[%s5 + $0x20] sm:$0xf]
      %v573 = vld [vmem:[%s5 + $0x24] sm:$0xf]
      %v574 = vld [vmem:[%s5 + $0x28] sm:$0xf]
      %v575 = vld [vmem:[%s5 + $0x2c] sm:$0xf]
      %v576 = vld [vmem:[%s5 + $0x30] sm:$0xf]
      %v577 = vld [vmem:[%s5 + $0x34] sm:$0xf]
      %v578 = vld [vmem:[%s5 + $0x38] sm:$0xf]
      %v579 = vld [vmem:[%s5 + $0x3c] sm:$0xf]
      %v580 = vld [vmem:[%s6] sm:$0x1]
      %v582 = vlaneseq
      %v583 = vshrl.u32 %v582, 7
      %v584 = vsub.s32 0, %v583
      %v585 = vrot.slane %v580, %v584
      %v603 = vunpack.c.l.b16 %v564
      %v604 = vunpack.c.l.b16 %v565
      %v605 = vunpack.c.l.b16 %v566
      %v606 = vunpack.c.l.b16 %v567
      %v607 = vunpack.c.l.b16 %v568
      %v608 = vunpack.c.l.b16 %v569
      %v609 = vunpack.c.l.b16 %v570
      %v610 = vunpack.c.l.b16 %v571
      %v611 = vunpack.c.l.b16 %v572
      %v612 = vunpack.c.l.b16 %v573
      %v613 = vunpack.c.l.b16 %v574
      %v614 = vunpack.c.l.b16 %v575
      %v615 = vunpack.c.l.b16 %v576
      %v616 = vunpack.c.l.b16 %v577
      %v617 = vunpack.c.l.b16 %v578
      %v618 = vunpack.c.l.b16 %v579
      %v619 = vpack.c.b16 %v604, %v603
      %v620 = vpack.c.b16 %v606, %v605
      %v621 = vpack.c.b16 %v608, %v607
      %v622 = vpack.c.b16 %v610, %v609
      %v623 = vpack.c.b16 %v612, %v611
      %v624 = vpack.c.b16 %v614, %v613
      %v625 = vpack.c.b16 %v616, %v615
      %v626 = vpack.c.b16 %v618, %v617
      %635 = vmatprep.subr.bf16.mxu0 0
      %636 = vmatpush1.bf16.msra.mxu0 %v626
      %637 = vmatprep.subr.bf16.mxu0 0
      %638 = vmatpush1.bf16.msra.mxu0 %v625
      %639 = vmatprep.subr.bf16.mxu0 0
      %640 = vmatpush1.bf16.msra.mxu0 %v624
      %641 = vmatprep.subr.bf16.mxu0 0
      %642 = vmatpush1.bf16.msra.mxu0 %v623
      %643 = vmatprep.subr.bf16.mxu0 0
      %644 = vmatpush1.bf16.msra.mxu0 %v622
      %645 = vmatprep.subr.bf16.mxu0 0
      %646 = vmatpush1.bf16.msra.mxu0 %v621
      %647 = vmatprep.subr.bf16.mxu0 0
      %648 = vmatpush1.bf16.msra.mxu0 %v620
      %649 = vmatprep.subr.bf16.mxu0 0
      %650 = vmatpush1.bf16.msra.mxu0 %v619
      %651 = vmatprep.subr.bf16.mxu0 0
      %652 = vmatpush2.bf16.msra.mxu0 0
      %653 = vmatprep.subr.bf16.mxu0 0
      %654 = vmatpush2.bf16.msra.mxu0 0
      %655 = vmatprep.subr.bf16.mxu0 0
      %656 = vmatpush2.bf16.msra.mxu0 0
      %657 = vmatprep.subr.bf16.mxu0 0
      %658 = vmatpush2.bf16.msra.mxu0 0
      %659 = vmatprep.subr.bf16.mxu0 0
      %660 = vmatpush2.bf16.msra.mxu0 0
      %661 = vmatprep.subr.bf16.mxu0 0
      %662 = vmatpush2.bf16.msra.mxu0 0
      %663 = vmatprep.subr.bf16.mxu0 0
      %664 = vmatpush2.bf16.msra.mxu0 0
      %665 = vmatprep.subr.bf16.mxu0 0
      %666 = vmatpush2.bf16.msra.mxu0 0
      %667 = vmatprep.mubr.bf16.mxu0 0
      %668 = vmatmul.mubr.bf16.gmra.mxu0 %v563
      %v669 = vpop.f32.mrf.mxu0
      %v670 = vadd.f32 %v585, %v669
      %v671 = vpop.f32.mrf.mxu0
      %v672 = vpop.f32.mrf.mxu0
      %v673 = vpop.f32.mrf.mxu0
      %674 = vdwg.mxu0
      %v675 = vmax.f32 %v670, 0.0
      %v676 = vpack.c.bf16 %v675, %v675
      %v677 = vld [vmem:[%s7] sm:$0xf]
      %v678 = vld [vmem:[%s7 + $0x4] sm:$0xf]
      %v679 = vld [vmem:[%s7 + $0x8] sm:$0xf]
      %v680 = vld [vmem:[%s7 + $0xc] sm:$0xf]
      %v681 = vld [vmem:[%s7 + $0x10] sm:$0xf]
      %v682 = vld [vmem:[%s7 + $0x14] sm:$0xf]
      %v683 = vld [vmem:[%s7 + $0x18] sm:$0xf]
      %v684 = vld [vmem:[%s7 + $0x1c] sm:$0xf]
      %v685 = vld [vmem:[%s8] sm:$0x1]
      %v687 = vlaneseq
      %v688 = vshrl.u32 %v687, 7
      %v689 = vsub.s32 0, %v688
      %v690 = vrot.slane %v685, %v689
      %v700 = vunpack.c.l.b16 %v677
      %v701 = vunpack.c.l.b16 %v678
      %v702 = vunpack.c.l.b16 %v679
      %v703 = vunpack.c.l.b16 %v680
      %v704 = vunpack.c.l.b16 %v681
      %v705 = vunpack.c.l.b16 %v682
      %v706 = vunpack.c.l.b16 %v683
      %v707 = vunpack.c.l.b16 %v684
      %v708 = vpack.c.b16 %v701, %v700
      %v709 = vpack.c.b16 %v703, %v702
      %v710 = vpack.c.b16 %v705, %v704
      %v711 = vpack.c.b16 %v707, %v706
      %vm716 = vcmask 523264
      %v718 = vsel %vm716, %v676, 0
      %720 = vmatprep.subr.bf16.mxu0 0
      %721 = vmatpush1.bf16.msra.mxu0 0
      %722 = vmatprep.subr.bf16.mxu0 0
      %723 = vmatpush1.bf16.msra.mxu0 0
      %724 = vmatprep.subr.bf16.mxu0 0
      %725 = vmatpush1.bf16.msra.mxu0 0
      %726 = vmatprep.subr.bf16.mxu0 0
      %727 = vmatpush1.bf16.msra.mxu0 0
      %728 = vmatprep.subr.bf16.mxu0 0
      %729 = vmatpush1.bf16.msra.mxu0 %v711
      %730 = vmatprep.subr.bf16.mxu0 0
      %731 = vmatpush1.bf16.msra.mxu0 %v710
      %732 = vmatprep.subr.bf16.mxu0 0
      %733 = vmatpush1.bf16.msra.mxu0 %v709
      %734 = vmatprep.subr.bf16.mxu0 0
      %735 = vmatpush1.bf16.msra.mxu0 %v708
      %736 = vmatprep.subr.bf16.mxu0 0
      %737 = vmatpush2.bf16.msra.mxu0 0
      %738 = vmatprep.subr.bf16.mxu0 0
      %739 = vmatpush2.bf16.msra.mxu0 0
      %740 = vmatprep.subr.bf16.mxu0 0
      %741 = vmatpush2.bf16.msra.mxu0 0
      %742 = vmatprep.subr.bf16.mxu0 0
      %743 = vmatpush2.bf16.msra.mxu0 0
      %744 = vmatprep.subr.bf16.mxu0 0
      %745 = vmatpush2.bf16.msra.mxu0 0
      %746 = vmatprep.subr.bf16.mxu0 0
      %747 = vmatpush2.bf16.msra.mxu0 0
      %748 = vmatprep.subr.bf16.mxu0 0
      %749 = vmatpush2.bf16.msra.mxu0 0
      %750 = vmatprep.subr.bf16.mxu0 0
      %751 = vmatpush2.bf16.msra.mxu0 0
      %752 = vmatprep.mubr.bf16.mxu0 0
      %753 = vmatmul.mubr.bf16.gmra.mxu0 %v718
      %v754 = vpop.f32.mrf.mxu0
      %v755 = vadd.f32 %v690, %v754
      %v756 = vpop.f32.mrf.mxu0
      %v757 = vpop.f32.mrf.mxu0
      %v758 = vpop.f32.mrf.mxu0
      %759 = vdwg.mxu0
      %v760 = vmax.f32 %v755, 0.0
      %v761 = vld [vmem:[%s9] sm:$0x1]
      %v763 = vlaneseq
      %v764 = vshrl.u32 %v763, 7
      %v765 = vsub.s32 0, %v764
      %v766 = vrot.slane %v761, %v765
      %v768 = vmul.f32 %v760, %v766
      %vm769 = vcmask 261120
      %v770 = vsel %vm769, %v768, 0.0
      %771 = vadd.xlane.f32.xlu0 %v770
      %v772 = vpop.xlane.xlu0 %771
      %v773 = vld [vmem:[#allocation2] sm:$0x1]
      %v775 = vlaneseq
      %v776 = vshrl.u32 %v775, 7
      %v777 = vsub.s32 0, %v776
      %v778 = vrot.slane %v773, %v777
      %v780 = vadd.f32 %v772, %v778
      %v781 = vmax.f32 %v780, 0.0
      %vm782 = vcmask 7168
      %783 = vst.msk [vmem:[%s383] sm:$0xff] %vm782, %v781
      %p784 = scmp.lt.s32.totalorder %s24, 2
      %s785 = scalar_select %p784, %s24, 2
      %s786 = smul.addr %s785, 8
      %s787 = scalar_lea.vmem %s11, %s786
      // Predicated region
      $region65: #{tpu_custom_call.1} parent=63 // pred_check
        %p788 = pneg %p278
      $region66: #{tpu_custom_call.1} parent=63 // pred_check_branch
        %790 = sbr.rel (%p788) target = $region68
      $region67: #{tpu_custom_call.1} parent=63 // pred_region
        _
      $region68: #{tpu_custom_call.1} parent=63 // pred_fallthru
        _
    $region64: #{tpu_custom_call.1} parent=5 // pred_fallthru
      _
    %p791 = scmp.le.s32.totalorder 2, %s19
    // Predicated region
    $region69: #{tpu_custom_call.1} parent=5 // pred_check
      %p792 = pneg %p791
    $region70: #{tpu_custom_call.1} parent=5 // pred_check_branch
      %794 = sbr.rel (%p792) target = $region72
    $region71: #{tpu_custom_call.1} parent=5 // pred_region
      %s795 = ssub.s32 %s19, 2
      // Predicated region
      $region73: #{tpu_custom_call.1} parent=71 // pred_check
        %p796 = pneg %p284
      $region74: #{tpu_custom_call.1} parent=71 // pred_check_branch
        %798 = sbr.rel (%p796) target = $region76
      $region75: #{tpu_custom_call.1} parent=71 // pred_region
        %p799 = scmp.lt.s32.totalorder %s25, 2
        %s800 = scalar_select %p799, %s25, 2
        %s801 = smul.addr %s800, 8
        %s802 = scalar_lea.vmem %s11, %s801
      $region76: #{tpu_custom_call.1} parent=71 // pred_fallthru
        _
    $region72: #{tpu_custom_call.1} parent=5 // pred_fallthru
      _
  $region6: #{tpu_custom_call.1} parent=0 // loop_footer
    %s23 = sadd.s32 1, %s19
  $region7: #{tpu_custom_call.1} parent=0 // loop_footer_branch
    %18 = sbr.rel target = $region3
  $region8: #{tpu_custom_call.1} parent=0 // loop_exit
    _

</llo_original>
